<compile_context>
chip_gen: v7x
topology: tpu7x:2x2x1
jax: 0.10.0
libtpu: 0.0.40
codegen_flags: <defaults>
</compile_context>

<pallas_src>
import jax
import jax.numpy as jnp
from jax import lax
from jax.experimental import pallas as pl
from jax.experimental.pallas import tpu as pltpu


def _mlp_proj_kernel(x_ref, w_ref, b_ref, o_ref):
    # x_ref: (C, tn)  channel-major token tile (native NCHW layout)
    # w_ref: (C, E)   W^T, fully VMEM-resident
    # b_ref: (1, E)
    # o_ref: (tn, E)
    acc = lax.dot_general(
        x_ref[...],                                    # (C, tn)
        w_ref[...],                                    # (C, E)
        dimension_numbers=(((0,), (0,)), ((), ())),    # contract over C
        preferred_element_type=jnp.float32,
    )                                                  # (tn, E), f32 MXU accumulate
    acc = acc + b_ref[...].astype(jnp.float32)         # bias add in f32 (VPU)
    # TODO(synk): for E < 128 a lane-dense (tn*E//128, 128) store layout would
    # avoid masked vst's; omitted because the in-kernel relayout is a Mosaic
    # lowering risk and real SegFormer embed dims (>=256) are already lane-dense.
    o_ref[...] = acc.astype(o_ref.dtype)


def _physical_vmem_bytes():
    try:
        return int(pltpu.get_tpu_info().vmem_capacity_bytes)
    except Exception:
        return 64 << 20          # v7x per-TC VMEM; the smallest across v5e/v6e/v7x


def _pick_token_tile(hw, c, e, itemsize, vmem_budget, batch,
                     *, min_total_steps=4, max_tn=2048):
    """Token tile: multiple of 128 (or full HW), capped at the roofline knee,
    under the VMEM budget, and small enough that the grid has several steps."""
    if hw <= 128:
        return int(hw)           # cannot split below one 128-lane tile
    # Double-buffered (C, tn) input + (tn, E) output tiles; weight + bias are
    # resident but Pallas still allocates two buffers for them.
    resident = 2 * (c + 1) * e * itemsize
    per_token = 2 * (c + e) * itemsize
    cap = max((vmem_budget - resident) // per_token, 128)
    tn = int(min(cap, max_tn, hw))
    tn = max(128, (tn // 128) * 128)
    # Shrink until there are enough grid steps for pipelining / both v7x cores.
    while tn > 128 and pl.cdiv(hw, tn) * batch < min_total_steps:
        tn -= 128
    return tn


def mlp_forward(x_nchw, weight, bias, *, vmem_budget_bytes=None):
    """Forward pass matching the PyTorch MLP (SegFormer linear embedding).

    x_nchw: (B, C, H, W); weight: (E, C) (PyTorch nn.Linear layout); bias: (E,).
    Returns (B, H*W, E) in the dtype of x_nchw.
    """
    B, C, H, W = x_nchw.shape
    E = weight.shape[0]
    HW = H * W

    compute_dtype = x_nchw.dtype
    itemsize = jnp.dtype(compute_dtype).itemsize

    # Clamp all VMEM numbers against the chip actually present (v7x: 64 MiB/TC).
    phys_vmem = _physical_vmem_bytes()
    vmem_limit_cap = max(32 << 20, min(phys_vmem - (16 << 20), (3 * phys_vmem) // 4))
    if vmem_budget_bytes is None:
        vmem_budget_bytes = min(28 << 20, vmem_limit_cap // 2)
    vmem_budget_bytes = min(int(vmem_budget_bytes), vmem_limit_cap // 2)

    # Free row-major reshape to the kernel's native layout — NO transpose, NO pad.
    x3 = x_nchw.reshape(B, C, HW)
    w_t = weight.T.astype(compute_dtype)   # (C, E), tiny, stays in VMEM
    b2 = bias.reshape(1, E)                # added in f32 inside the kernel

    tn = _pick_token_tile(HW, C, E, itemsize, vmem_budget_bytes, B)
    n_tiles = pl.cdiv(HW, tn)              # ragged last tile handled by Pallas masking

    vmem_need = 2 * tn * (C + E) * itemsize + 2 * (C + 1) * E * itemsize
    vmem_limit = int(min(vmem_limit_cap, max(32 << 20, vmem_need + (4 << 20))))

    flops = 2 * B * HW * C * E
    bytes_accessed = (B * HW * C * itemsize                    # activations in
                      + C * E * itemsize                       # weight
                      + E * jnp.dtype(bias.dtype).itemsize     # bias
                      + B * HW * E * itemsize)                 # activations out

    grid_spec = pltpu.PrefetchScalarGridSpec(
        num_scalar_prefetch=0,
        grid=(B, n_tiles),
        in_specs=[
            # Native-layout activation tile: (C, tn), lane-dense on tokens.
            pl.BlockSpec((None, C, tn), lambda b, i: (b, 0, i)),
            # Weight / bias fully resident (constant index map).
            pl.BlockSpec((C, E), lambda b, i: (0, 0)),
            pl.BlockSpec((1, E), lambda b, i: (0, 0)),
        ],
        out_specs=pl.BlockSpec((None, tn, E), lambda b, i: (b, i, 0)),
    )

    return pl.pallas_call(
        _mlp_proj_kernel,
        out_shape=jax.ShapeDtypeStruct((B, HW, E), compute_dtype),
        grid_spec=grid_spec,
        compiler_params=pltpu.CompilerParams(
            dimension_semantics=("parallel", "parallel"),
            vmem_limit_bytes=vmem_limit,
        ),
        cost_estimate=pl.CostEstimate(
            flops=int(flops),
            transcendentals=0,
            bytes_accessed=int(bytes_accessed),
        ),
    )(x3, w_t, b2)


if __name__ == "__main__":
    # Small shapes consistent with the module: input_dim=C=4, embed_dim=E=32.
    B, C, H, W = 2, 4, 16, 16
    E = 32

    key = jax.random.PRNGKey(0)
    kx, kw, kb = jax.random.split(key, 3)

    x = jax.random.normal(kx, (B, C, H, W), dtype=jnp.float32)
    bound = 1.0 / (C ** 0.5)
    weight = jax.random.uniform(kw, (E, C), jnp.float32, -bound, bound)
    bias = jax.random.uniform(kb, (E,), jnp.float32, -bound, bound)

    # Pure-JAX reference (matches the PyTorch module).
    ref = jnp.einsum(
        "bnc,ec->bne",
        jnp.transpose(x.reshape(B, C, H * W), (0, 2, 1)),
        weight,
    ) + bias

    # f32 path: matches the original module's numerics.
    out = jax.block_until_ready(mlp_forward(x, weight, bias))
    assert out.shape == (B, H * W, E)
    assert out.dtype == jnp.float32
    assert jnp.allclose(out, ref, atol=1e-4, rtol=1e-4)

    # bf16 activation/weight path: halves HBM traffic on this mem-bound op;
    # the kernel still accumulates in f32 and adds the bias in f32.
    out_bf16 = jax.block_until_ready(
        mlp_forward(x.astype(jnp.bfloat16), weight.astype(jnp.bfloat16), bias)
    )
    assert out_bf16.shape == (B, H * W, E)
    assert out_bf16.dtype == jnp.bfloat16
    assert jnp.allclose(out_bf16.astype(jnp.float32), ref, atol=1e-1, rtol=1e-1)

    print("KERNEL_OK")
</pallas_src>

<mosaic_0001>
module attributes {stable_mosaic.version = 11 : i64} {
  func.func @_mlp_proj_kernel(%arg0: i32, %arg1: i32, %arg2: memref<1x4x128xf32, #tpu.memory_space<vmem>>, %arg3: memref<4x32xf32, #tpu.memory_space<vmem>>, %arg4: memref<1x32xf32, #tpu.memory_space<vmem>>, %arg5: memref<1x128x32xf32, #tpu.memory_space<vmem>>) attributes {dimension_semantics = [#tpu.dimension_semantics<parallel>, #tpu.dimension_semantics<parallel>], iteration_bounds = array<i64: 2, 2>, scalar_prefetch = 0 : i64, scratch_operands = 0 : i64, tpu.core_type = #tpu.core_type<tc>, window_params = [{transform_indices = @transform_0, window_bounds = array<i64: 1, 4, 128>}, {pipeline_mode = #tpu.pipeline_mode<synchronous>, transform_indices = @transform_1, window_bounds = array<i64: 4, 32>}, {pipeline_mode = #tpu.pipeline_mode<synchronous>, transform_indices = @transform_2, window_bounds = array<i64: 1, 32>}, {transform_indices = @transform_3, window_bounds = array<i64: 1, 128, 32>}]} {
    %c0 = arith.constant 0 : index
    %c0_0 = arith.constant 0 : index
    %c0_1 = arith.constant 0 : index
    %0 = vector.load %arg2[%c0, %c0_0, %c0_1] : memref<1x4x128xf32, #tpu.memory_space<vmem>>, vector<1x4x128xf32>
    %1 = vector.shape_cast %0 : vector<1x4x128xf32> to vector<4x128xf32>
    %c0_2 = arith.constant 0 : index
    %c0_3 = arith.constant 0 : index
    %2 = vector.load %arg3[%c0_2, %c0_3] : memref<4x32xf32, #tpu.memory_space<vmem>>, vector<4x32xf32>
    %cst = arith.constant dense<0.000000e+00> : vector<128x32xf32>
    %3 = tpu.matmul %1, %2, %cst {dimension_numbers = #tpu.dot_dimension_numbers<[0], [0], [1], [1], [0, 1, 1, 1], [], []>} : vector<4x128xf32>, vector<4x32xf32>, vector<128x32xf32> -> vector<128x32xf32>
    %c0_4 = arith.constant 0 : index
    %c0_5 = arith.constant 0 : index
    %4 = vector.load %arg4[%c0_4, %c0_5] : memref<1x32xf32, #tpu.memory_space<vmem>>, vector<1x32xf32>
    %5 = vector.broadcast %4 : vector<1x32xf32> to vector<128x32xf32>
    %6 = arith.addf %3, %5 : vector<128x32xf32>
    %c0_6 = arith.constant 0 : index
    %c0_7 = arith.constant 0 : index
    %c0_8 = arith.constant 0 : index
    %7 = vector.load %arg5[%c0_6, %c0_7, %c0_8] : memref<1x128x32xf32, #tpu.memory_space<vmem>>, vector<1x128x32xf32>
    %8 = vector.shape_cast %7 : vector<1x128x32xf32> to vector<128x32xf32>
    %9 = vector.shape_cast %6 : vector<128x32xf32> to vector<1x128x32xf32>
    tpu.vector_store %arg5[%c0_6, %c0_7, %c0_8], %9 {strides = array<i32>} : memref<1x128x32xf32, #tpu.memory_space<vmem>>, vector<1x128x32xf32>,
    return
  }
  func.func @transform_0(%arg0: i32, %arg1: i32) -> (i32, i32, i32) {
    %c0_i32 = arith.constant 0 : i32
    %c0_i32_0 = arith.constant 0 : i32
    return %arg0, %c0_i32, %arg1 : i32, i32, i32
  }
  func.func @transform_1(%arg0: i32, %arg1: i32) -> (i32, i32) {
    %c0_i32 = arith.constant 0 : i32
    %c0_i32_0 = arith.constant 0 : i32
    %c0_i32_1 = arith.constant 0 : i32
    return %c0_i32, %c0_i32_0 : i32, i32
  }
  func.func @transform_2(%arg0: i32, %arg1: i32) -> (i32, i32) {
    %c0_i32 = arith.constant 0 : i32
    %c0_i32_0 = arith.constant 0 : i32
    %c0_i32_1 = arith.constant 0 : i32
    return %c0_i32, %c0_i32_0 : i32, i32
  }
  func.func @transform_3(%arg0: i32, %arg1: i32) -> (i32, i32, i32) {
    %c0_i32 = arith.constant 0 : i32
    %c0_i32_0 = arith.constant 0 : i32
    return %arg0, %arg1, %c0_i32 : i32, i32, i32
  }
}

</mosaic_0001>

<llo_original>
// kernel: tpu_custom_call.1
$region0: #{tpu_custom_call.1}
  #allocation0 [shape = 'u32[]', space=smem, size = 0x4, offset = 0x4, fixed_abs, tag = 'smem constant byte address 0x4 - core index']
  #allocation1 [shape = 'u32[144,128]{1,0:T(1,128)}', space=vmem, size = 0x12000, scoped, tag = 'internal scratch']
  %s0 = inlined_call_operand.hbm [shape: f32[2,4,256], index: 0, kind: input, shape index: {}]
  %s1 = inlined_call_operand.hbm [shape: f32[4,32], index: 1, kind: input, shape index: {}]
  %s2 = inlined_call_operand.vmem [shape: f32[1,32], index: 2, kind: input, shape index: {}]
  %s3 = inlined_call_operand.vmem [shape: f32[2,256,32], index: 3, kind: output, shape index: {}]
  %s4 = sld [smem:[#allocation0]]
  $region53: #{tpu_custom_call.1} parent=0
    _
  %s6 = ssub.s32 1, %s4
  %s7 = scalar_select 0, %s6, %s4
  $region1: #{tpu_custom_call.1} parent=0
    #allocation2 [shape = 'u8[4096]{0}', space=vmem, size = 0x1000, scoped, tag = 'input window, operand 0']
    #allocation3 [shape = 's32[2]{0}', space=sflag, size = 0x8, scoped, tag = 'scoped memory for tpu_custom_call.1']
    #allocation4 [shape = 'u8[2048]{0}', space=vmem, size = 0x800, scoped, tag = 'input window, operand 1, single buffered']
    #allocation5 [shape = 's32[1]{0}', space=sflag, size = 0x4, scoped, tag = 'scoped memory for tpu_custom_call.1']
    %8 = vsyncpa [#allocation3], 0
    %s9 = scalar_lea.sflag [#allocation3], 1
    %10 = vsyncpa %s9, 0
    %11 = vsyncpa [#allocation5], 0
    loop: start=0, step=1, limit=6
    $region2: #{tpu_custom_call.1} parent=1 // loop_pre_header
      _
    $region3: #{tpu_custom_call.1} parent=1 // loop_header
      %s13 = sphi 0, %s17
      %p14 = scmp.ge.s32.totalorder %s13, 6
      %s20 = sphi 0, %s32
      %s21 = sphi 0, %s28
      %s22 = sphi 0, %s20
      %s23 = sphi 0, %s21
      %s24 = sphi 0, %s22
      %s25 = sphi 0, %s23
      %s37 = sphi 0, %s39
      %s40 = sphi 0, %s37
      %s41 = sphi 0, %s40
      %s57 = sphi 0, %s41
      %s61 = sphi 0, %s61
      %s63 = sphi 0, %s61
      %s64 = sphi 0, %s63
      %s78 = sphi 0, %s64
      %s82 = sphi 0, %s82
      %s84 = sphi 0, %s82
      %s85 = sphi 0, %s84
      %s99 = sphi 0, %s85
      %s107 = sphi 0, %s109
      %s110 = sphi 0, %s107
      %s111 = sphi 0, %s110
      %s127 = sphi 0, %s111
    $region4: #{tpu_custom_call.1} parent=1 // loop_header_branch
      %16 = sbr.rel (%p14) target = $region8
    $region5: #{tpu_custom_call.1} parent=1 // loop_body
      %s18 = ssub.s32 %s13, 1
      %s19 = ssub.s32 %s13, 2
      %s26 = sadd.s32 1, %s21
      %p27 = scmp.ge.s32.totalorder %s26, 2
      %s28 = scalar_select %p27, 0, %s26
      %s29 = sadd.s32 1, %s20
      %s30 = scalar_select %p27, %s29, %s20
      %p31 = scmp.ge.s32.totalorder %s30, 2
      %s32 = scalar_select %p31, 0, %s30
      %s33 = ssub.s32 %s20, %s32
      %s34 = ssub.s32 %s21, %s28
      %s35 = sor.u32 %s33, %s34
      %p36 = scmp.eq.s32.totalorder %s35, 0
      %s38 = sadd.s32 %s37, 1
      %s39 = scalar_select %p36, %s37, %s38
      %p42 = pneg %p36
      %p43 = scmp.eq.s32.totalorder %s13, 3
      %p44 = por %p42, %p43
      %p45 = scmp.ne.s32.totalorder %s37, %s40
      %p46 = scmp.eq.s32.totalorder %s13, 0
      %p47 = por %p45, %p46
      %p48 = scmp.ne.s32.totalorder %s37, %s40
      %p49 = scmp.eq.s32.totalorder %s18, 3
      %p50 = por %p48, %p49
      %p51 = scmp.ne.s32.totalorder %s40, %s41
      %p52 = scmp.eq.s32.totalorder %s18, 0
      %p53 = por %p51, %p52
      %p54 = scmp.ne.s32.totalorder %s40, %s41
      %p55 = scmp.eq.s32.totalorder %s19, 3
      %p56 = por %p54, %p55
      %p58 = scmp.ne.s32.totalorder %s41, %s57
      %p59 = scmp.eq.s32.totalorder %s19, 0
      %p60 = por %p58, %p59
      %s62 = sadd.s32 %s61, 1
      %p65 = scmp.eq.s32.totalorder %s13, 3
      %p66 = scmp.ne.s32.totalorder %s61, %s63
      %p67 = scmp.eq.s32.totalorder %s13, 0
      %p68 = por %p66, %p67
      %p69 = scmp.ne.s32.totalorder %s61, %s63
      %p70 = scmp.eq.s32.totalorder %s18, 3
      %p71 = por %p69, %p70
      %p72 = scmp.ne.s32.totalorder %s63, %s64
      %p73 = scmp.eq.s32.totalorder %s18, 0
      %p74 = por %p72, %p73
      %p75 = scmp.ne.s32.totalorder %s63, %s64
      %p76 = scmp.eq.s32.totalorder %s19, 3
      %p77 = por %p75, %p76
      %p79 = scmp.ne.s32.totalorder %s64, %s78
      %p80 = scmp.eq.s32.totalorder %s19, 0
      %p81 = por %p79, %p80
      %s83 = sadd.s32 %s82, 1
      %p86 = scmp.eq.s32.totalorder %s13, 3
      %p87 = scmp.ne.s32.totalorder %s82, %s84
      %p88 = scmp.eq.s32.totalorder %s13, 0
      %p89 = por %p87, %p88
      %p90 = scmp.ne.s32.totalorder %s82, %s84
      %p91 = scmp.eq.s32.totalorder %s18, 3
      %p92 = por %p90, %p91
      %p93 = scmp.ne.s32.totalorder %s84, %s85
      %p94 = scmp.eq.s32.totalorder %s18, 0
      %p95 = por %p93, %p94
      %p96 = scmp.ne.s32.totalorder %s84, %s85
      %p97 = scmp.eq.s32.totalorder %s19, 3
      %p98 = por %p96, %p97
      %p100 = scmp.ne.s32.totalorder %s85, %s99
      %p101 = scmp.eq.s32.totalorder %s19, 0
      %p102 = por %p100, %p101
      %s103 = ssub.s32 %s20, %s32
      %s104 = ssub.s32 %s21, %s28
      %s105 = sor.u32 %s103, %s104
      %p106 = scmp.eq.s32.totalorder %s105, 0
      %s108 = sadd.s32 %s107, 1
      %s109 = scalar_select %p106, %s107, %s108
      %p112 = pneg %p106
      %p113 = scmp.eq.s32.totalorder %s13, 3
      %p114 = por %p112, %p113
      %p115 = scmp.ne.s32.totalorder %s107, %s110
      %p116 = scmp.eq.s32.totalorder %s13, 0
      %p117 = por %p115, %p116
      %p118 = scmp.ne.s32.totalorder %s107, %s110
      %p119 = scmp.eq.s32.totalorder %s18, 3
      %p120 = por %p118, %p119
      %p121 = scmp.ne.s32.totalorder %s110, %s111
      %p122 = scmp.eq.s32.totalorder %s18, 0
      %p123 = por %p121, %p122
      %p124 = scmp.ne.s32.totalorder %s110, %s111
      %p125 = scmp.eq.s32.totalorder %s19, 3
      %p126 = por %p124, %p125
      %p128 = scmp.ne.s32.totalorder %s111, %s127
      %p129 = scmp.eq.s32.totalorder %s19, 0
      %p130 = por %p128, %p129
      %p131 = scmp.le.s32.totalorder 1, %s13
      %p132 = scmp.lt.s32.totalorder %s13, 5
      %p133 = pnand %p131, %p132
      %p134 = pneg %p133
      // Predicated region
      $region9: #{tpu_custom_call.1} parent=5 // pred_check
        _
      $region10: #{tpu_custom_call.1} parent=5 // pred_check_branch
        %136 = sbr.rel (%p133) target = $region12
      $region11: #{tpu_custom_call.1} parent=5 // pred_region
        %s137 = ssub.s32 %s13, 1
        // Predicated region
        $region13: #{tpu_custom_call.1} parent=11 // pred_check
          %p138 = pneg %p74
        $region14: #{tpu_custom_call.1} parent=11 // pred_check_branch
          %140 = sbr.rel (%p138) target = $region16
        $region15: #{tpu_custom_call.1} parent=11 // pred_region
          %s142 = ssub.s32 64, 64
          %143 = vsyncadd [#allocation5], %s142
          %s145 = sshll.u32 [#allocation4], 4
          %s146 = int_to_ptr.vmem [resolvable:$true] %s145
          %148 = dma.hbm_to_vmem [thread:$0]  %s1, 64, %s146, [#allocation5]
        $region16: #{tpu_custom_call.1} parent=11 // pred_fallthru
          _
        // Predicated region
        $region17: #{tpu_custom_call.1} parent=11 // pred_check
          %p149 = pneg %p95
        $region18: #{tpu_custom_call.1} parent=11 // pred_check_branch
          %151 = sbr.rel (%p149) target = $region20
        $region19: #{tpu_custom_call.1} parent=11 // pred_region
          _
        $region20: #{tpu_custom_call.1} parent=11 // pred_fallthru
          _
      $region12: #{tpu_custom_call.1} parent=5 // pred_fallthru
        _
      %p152 = scmp.lt.s32.totalorder %s13, 4
      // Predicated region
      $region21: #{tpu_custom_call.1} parent=5 // pred_check
        %p153 = pneg %p152
      $region22: #{tpu_custom_call.1} parent=5 // pred_check_branch
        %155 = sbr.rel (%p153) target = $region24
      $region23: #{tpu_custom_call.1} parent=5 // pred_region
        // Predicated region
        $region25: #{tpu_custom_call.1} parent=23 // pred_check
          %p156 = pneg %p47
        $region26: #{tpu_custom_call.1} parent=23 // pred_check_branch
          %158 = sbr.rel (%p156) target = $region28
        $region27: #{tpu_custom_call.1} parent=23 // pred_region
          %s159 = sand.u32 %s37, 1
          %s160 = scalar_lea.sflag [#allocation3], %s159
          %s161 = sand.u32 %s37, 1
          %s162 = smul.addr %s161, 4
          %s163 = scalar_lea.vmem [#allocation2], %s162
          %s165 = ssub.s32 64, 64
          %166 = vsyncadd %s160, %s165
          %s167 = smul.addr %s20, 2
          %s168 = sadd.s32 %s21, %s167
          %s169 = smul.addr %s168, 64
          %s170 = scalar_lea.hbm %s0, %s169
          %s172 = sshll.u32 %s163, 4
          %s173 = int_to_ptr.vmem [resolvable:$true] %s172
          %175 = dma.hbm_to_vmem [thread:$0]  %s170, 64, %s173, %s160
        $region28: #{tpu_custom_call.1} parent=23 // pred_fallthru
          _
      $region24: #{tpu_custom_call.1} parent=5 // pred_fallthru
        _
      %p176 = scmp.le.s32.totalorder 1, %s13
      %p177 = scmp.lt.s32.totalorder %s13, 5
      %p178 = pnand %p176, %p177
      %p179 = pneg %p178
      // Predicated region
      $region29: #{tpu_custom_call.1} parent=5 // pred_check
        _
      $region30: #{tpu_custom_call.1} parent=5 // pred_check_branch
        %181 = sbr.rel (%p178) target = $region32
      $region31: #{tpu_custom_call.1} parent=5 // pred_region
        %s182 = ssub.s32 %s13, 1
        %s183 = sand.u32 %s40, 1
        %s184 = scalar_lea.sflag [#allocation3], %s183
        %s185 = sand.u32 %s40, 1
        %s186 = smul.addr %s185, 4
        %s187 = scalar_lea.vmem [#allocation2], %s186
        // Predicated region
        $region33: #{tpu_custom_call.1} parent=31 // pred_check
          %p188 = pneg %p53
        $region34: #{tpu_custom_call.1} parent=31 // pred_check_branch
          %190 = sbr.rel (%p188) target = $region36
        $region35: #{tpu_custom_call.1} parent=31 // pred_region
          %191 = dma.done %s184, 64
        $region36: #{tpu_custom_call.1} parent=31 // pred_fallthru
          _
        // Predicated region
        $region37: #{tpu_custom_call.1} parent=31 // pred_check
          %p192 = pneg %p74
        $region38: #{tpu_custom_call.1} parent=31 // pred_check_branch
          %194 = sbr.rel (%p192) target = $region40
        $region39: #{tpu_custom_call.1} parent=31 // pred_region
          %195 = dma.done [#allocation5], 64
        $region40: #{tpu_custom_call.1} parent=31 // pred_fallthru
          _
        %s196 = sand.u32 %s40, 1
        %s197 = scalar_lea.sflag [#allocation3], %s196
        %s198 = sand.u32 %s40, 1
        %s199 = smul.addr %s198, 4
        %s200 = scalar_lea.vmem [#allocation2], %s199
        %p201 = pneg %p53
        %p202 = pneg %p50
        %p203 = pneg %p74
        %p204 = pneg %p71
        %p205 = pneg %p95
        %p206 = pneg %p92
        %p207 = pneg %p123
        %p208 = pneg %p120
        %s209 = smul.u32 16, %s23
        %p210 = scmp.lt.s32.totalorder %s22, 1
        %s211 = scalar_select %p210, %s22, 1
        %p212 = scmp.lt.s32.totalorder %s209, 31
        %s213 = scalar_select %p212, %s209, 31
        %s214 = smul.addr %s211, 32
        %s215 = sadd.s32 %s213, %s214
        %s216 = smul.addr %s215, 8
        %s217 = scalar_lea.vmem %s3, %s216
        %s218 = smul.u32 16, %s23
        %p219 = scmp.lt.s32.totalorder %s22, 1
        %s220 = scalar_select %p219, %s22, 1
        %p221 = scmp.lt.s32.totalorder %s218, 31
        %s222 = scalar_select %p221, %s218, 31
        %s223 = smul.addr %s220, 32
        %s224 = sadd.s32 %s222, %s223
        %s225 = smul.addr %s224, 8
        %s226 = scalar_lea.vmem %s3, %s225
        %s227 = smul.u32 16, %s23
        %v228 = vld [vmem:[%s187] sm:$0xf]
        %v229 = vld [vmem:[#allocation4] sm:$0xf]
        %v230 = vld [vmem:[%s2] sm:$0x1]
        %v232 = vlaneseq
        %v233 = vshrl.u32 %v232, 7
        %v234 = vsub.s32 0, %v233
        %v235 = vrot.slane %v230, %v234
        %237 = vxpose.xlu0.b32.start [1/16] %v228, 128
        %238 = vxpose.xlu0.b32.cont [2/16] 0.0, 128
        %239 = vxpose.xlu0.b32.cont [3/16] 0.0, 128
        %240 = vxpose.xlu0.b32.cont [4/16] 0.0, 128
        %241 = vxpose.xlu0.b32.cont [5/16] 0.0, 128
        %242 = vxpose.xlu0.b32.cont [6/16] 0.0, 128
        %243 = vxpose.xlu0.b32.cont [7/16] 0.0, 128
        %244 = vxpose.xlu0.b32.cont [8/16] 0.0, 128
        %245 = vxpose.xlu0.b32.cont [9/16] 0.0, 128
        %246 = vxpose.xlu0.b32.cont [10/16] 0.0, 128
        %247 = vxpose.xlu0.b32.cont [11/16] 0.0, 128
        %248 = vxpose.xlu0.b32.cont [12/16] 0.0, 128
        %249 = vxpose.xlu0.b32.cont [13/16] 0.0, 128
        %250 = vxpose.xlu0.b32.cont [14/16] 0.0, 128
        %251 = vxpose.xlu0.b32.cont [15/16] 0.0, 128
        %252 = vxpose.xlu0.b32.end [16/16] 0.0, 128
        %v253 = vpop.trf.xlu0
        %v254 = vpop.trf.xlu0
        %v255 = vpop.trf.xlu0
        %v256 = vpop.trf.xlu0
        %v257 = vpop.trf.xlu0
        %v258 = vpop.trf.xlu0
        %v259 = vpop.trf.xlu0
        %v260 = vpop.trf.xlu0
        %v261 = vpop.trf.xlu0
        %v262 = vpop.trf.xlu0
        %v263 = vpop.trf.xlu0
        %v264 = vpop.trf.xlu0
        %v265 = vpop.trf.xlu0
        %v266 = vpop.trf.xlu0
        %v267 = vpop.trf.xlu0
        %v268 = vpop.trf.xlu0
        %vm269 = vcmask 31744
        %v271 = vsel %vm269, %v253, 0
        %v274 = vsel %vm269, %v254, 0
        %v277 = vsel %vm269, %v255, 0
        %v280 = vsel %vm269, %v256, 0
        %v283 = vsel %vm269, %v257, 0
        %v286 = vsel %vm269, %v258, 0
        %v289 = vsel %vm269, %v259, 0
        %v292 = vsel %vm269, %v260, 0
        %v295 = vsel %vm269, %v261, 0
        %v298 = vsel %vm269, %v262, 0
        %v301 = vsel %vm269, %v263, 0
        %v304 = vsel %vm269, %v264, 0
        %v307 = vsel %vm269, %v265, 0
        %v310 = vsel %vm269, %v266, 0
        %v313 = vsel %vm269, %v267, 0
        %v316 = vsel %vm269, %v268, 0
        %vm318 = vcmask 1043456
        %v320 = vsel %vm318, %v229, 0
        %322 = vmatprep.subr.mxu0 0.0
        %323 = vmatpush1.msra.mxu0 %v320
        %324 = vmatprep.subr.mxu0 0.0
        %325 = vmatpush1.msra.mxu0 0.0
        %326 = vmatprep.subr.mxu0 0.0
        %327 = vmatpush1.msra.mxu0 0.0
        %328 = vmatprep.subr.mxu0 0.0
        %329 = vmatpush1.msra.mxu0 0.0
        %330 = vmatprep.subr.mxu0 0.0
        %331 = vmatpush1.msra.mxu0 0.0
        %332 = vmatprep.subr.mxu0 0.0
        %333 = vmatpush1.msra.mxu0 0.0
        %334 = vmatprep.subr.mxu0 0.0
        %335 = vmatpush1.msra.mxu0 0.0
        %336 = vmatprep.subr.mxu0 0.0
        %337 = vmatpush1.msra.mxu0 0.0
        %338 = vmatprep.subr.mxu0 0.0
        %339 = vmatpush1.msra.mxu0 0.0
        %340 = vmatprep.subr.mxu0 0.0
        %341 = vmatpush1.msra.mxu0 0.0
        %342 = vmatprep.subr.mxu0 0.0
        %343 = vmatpush1.msra.mxu0 0.0
        %344 = vmatprep.subr.mxu0 0.0
        %345 = vmatpush1.msra.mxu0 0.0
        %346 = vmatprep.subr.mxu0 0.0
        %347 = vmatpush1.msra.mxu0 0.0
        %348 = vmatprep.subr.mxu0 0.0
        %349 = vmatpush1.msra.mxu0 0.0
        %350 = vmatprep.subr.mxu0 0.0
        %351 = vmatpush1.msra.mxu0 0.0
        %352 = vmatprep.subr.mxu0 0.0
        %353 = vmatpush1.msra.mxu0 0.0
        %354 = vmatprep.subr.mxu0 0.0
        %355 = vmatpush1.msra.mxu0 0.0
        %356 = vmatprep.subr.mxu0 0.0
        %357 = vmatpush1.msra.mxu0 0.0
        %358 = vmatprep.subr.mxu0 0.0
        %359 = vmatpush1.msra.mxu0 0.0
        %360 = vmatprep.subr.mxu0 0.0
        %361 = vmatpush1.msra.mxu0 0.0
        %362 = vmatprep.subr.mxu0 0.0
        %363 = vmatpush1.msra.mxu0 0.0
        %364 = vmatprep.subr.mxu0 0.0
        %365 = vmatpush1.msra.mxu0 0.0
        %366 = vmatprep.subr.mxu0 0.0
        %367 = vmatpush1.msra.mxu0 0.0
        %368 = vmatprep.subr.mxu0 0.0
        %369 = vmatpush1.msra.mxu0 0.0
        %370 = vmatprep.subr.mxu0 0.0
        %371 = vmatpush1.msra.mxu0 0.0
        %372 = vmatprep.subr.mxu0 0.0
        %373 = vmatpush1.msra.mxu0 0.0
        %374 = vmatprep.subr.mxu0 0.0
        %375 = vmatpush1.msra.mxu0 0.0
        %376 = vmatprep.subr.mxu0 0.0
        %377 = vmatpush1.msra.mxu0 0.0
        %378 = vmatprep.subr.mxu0 0.0
        %379 = vmatpush1.msra.mxu0 0.0
        %380 = vmatprep.subr.mxu0 0.0
        %381 = vmatpush1.msra.mxu0 0.0
        %382 = vmatprep.subr.mxu0 0.0
        %383 = vmatpush1.msra.mxu0 0.0
        %384 = vmatprep.subr.mxu0 0.0
        %385 = vmatpush1.msra.mxu0 0.0
        %386 = vmatprep.mubr.f32.mxu0 0.0
        %387 = vmatmul.mubr.f32.gmra.mrb[0].mxu0 %v271
        %v388 = vpop.f32.mrb[0].mxu0
        %v389 = vadd.f32 %v235, %v388
        %v390 = vpop.f32.mrb[0].mxu0
        %391 = vmatprep.mubr.f32.mxu0 0.0
        %392 = vmatmul.mubr.f32.gmra.mrb[0].mxu0 %v274
        %v393 = vpop.f32.mrb[0].mxu0
        %v394 = vadd.f32 %v235, %v393
        %v395 = vpop.f32.mrb[0].mxu0
        %396 = vmatprep.mubr.f32.mxu0 0.0
        %397 = vmatmul.mubr.f32.gmra.mrb[0].mxu0 %v277
        %v398 = vpop.f32.mrb[0].mxu0
        %v399 = vadd.f32 %v235, %v398
        %v400 = vpop.f32.mrb[0].mxu0
        %401 = vmatprep.mubr.f32.mxu0 0.0
        %402 = vmatmul.mubr.f32.gmra.mrb[0].mxu0 %v280
        %v403 = vpop.f32.mrb[0].mxu0
        %v404 = vadd.f32 %v235, %v403
        %v405 = vpop.f32.mrb[0].mxu0
        %406 = vmatprep.mubr.f32.mxu0 0.0
        %407 = vmatmul.mubr.f32.gmra.mrb[0].mxu0 %v283
        %v408 = vpop.f32.mrb[0].mxu0
        %v409 = vadd.f32 %v235, %v408
        %v410 = vpop.f32.mrb[0].mxu0
        %411 = vmatprep.mubr.f32.mxu0 0.0
        %412 = vmatmul.mubr.f32.gmra.mrb[0].mxu0 %v286
        %v413 = vpop.f32.mrb[0].mxu0
        %v414 = vadd.f32 %v235, %v413
        %v415 = vpop.f32.mrb[0].mxu0
        %416 = vmatprep.mubr.f32.mxu0 0.0
        %417 = vmatmul.mubr.f32.gmra.mrb[0].mxu0 %v289
        %v418 = vpop.f32.mrb[0].mxu0
        %v419 = vadd.f32 %v235, %v418
        %v420 = vpop.f32.mrb[0].mxu0
        %421 = vmatprep.mubr.f32.mxu0 0.0
        %422 = vmatmul.mubr.f32.gmra.mrb[0].mxu0 %v292
        %v423 = vpop.f32.mrb[0].mxu0
        %v424 = vadd.f32 %v235, %v423
        %v425 = vpop.f32.mrb[0].mxu0
        %426 = vmatprep.mubr.f32.mxu0 0.0
        %427 = vmatmul.mubr.f32.gmra.mrb[0].mxu0 %v295
        %v428 = vpop.f32.mrb[0].mxu0
        %v429 = vadd.f32 %v235, %v428
        %v430 = vpop.f32.mrb[0].mxu0
        %431 = vmatprep.mubr.f32.mxu0 0.0
        %432 = vmatmul.mubr.f32.gmra.mrb[0].mxu0 %v298
        %v433 = vpop.f32.mrb[0].mxu0
        %v434 = vadd.f32 %v235, %v433
        %v435 = vpop.f32.mrb[0].mxu0
        %436 = vmatprep.mubr.f32.mxu0 0.0
        %437 = vmatmul.mubr.f32.gmra.mrb[0].mxu0 %v301
        %v438 = vpop.f32.mrb[0].mxu0
        %v439 = vadd.f32 %v235, %v438
        %v440 = vpop.f32.mrb[0].mxu0
        %441 = vmatprep.mubr.f32.mxu0 0.0
        %442 = vmatmul.mubr.f32.gmra.mrb[0].mxu0 %v304
        %v443 = vpop.f32.mrb[0].mxu0
        %v444 = vadd.f32 %v235, %v443
        %v445 = vpop.f32.mrb[0].mxu0
        %446 = vmatprep.mubr.f32.mxu0 0.0
        %447 = vmatmul.mubr.f32.gmra.mrb[0].mxu0 %v307
        %v448 = vpop.f32.mrb[0].mxu0
        %v449 = vadd.f32 %v235, %v448
        %v450 = vpop.f32.mrb[0].mxu0
        %451 = vmatprep.mubr.f32.mxu0 0.0
        %452 = vmatmul.mubr.f32.gmra.mrb[0].mxu0 %v310
        %v453 = vpop.f32.mrb[0].mxu0
        %v454 = vadd.f32 %v235, %v453
        %v455 = vpop.f32.mrb[0].mxu0
        %456 = vmatprep.mubr.f32.mxu0 0.0
        %457 = vmatmul.mubr.f32.gmra.mrb[0].mxu0 %v313
        %v458 = vpop.f32.mrb[0].mxu0
        %v459 = vadd.f32 %v235, %v458
        %v460 = vpop.f32.mrb[0].mxu0
        %461 = vmatprep.mubr.f32.mxu0 0.0
        %462 = vmatmul.mubr.f32.gmra.mrb[0].mxu0 %v316
        %v463 = vpop.f32.mrb[0].mxu0
        %v464 = vadd.f32 %v235, %v463
        %v465 = vpop.f32.mrb[0].mxu0
        %466 = vdwg.mxu0
        %vm467 = vcmask 261120
        %468 = vst.msk [vmem:[%s226] sm:$0xff] %vm467, %v389
        %469 = vst.msk [vmem:[%s226 + $0x8] sm:$0xff] %vm467, %v394
        %470 = vst.msk [vmem:[%s226 + $0x10] sm:$0xff] %vm467, %v399
        %471 = vst.msk [vmem:[%s226 + $0x18] sm:$0xff] %vm467, %v404
        %472 = vst.msk [vmem:[%s226 + $0x20] sm:$0xff] %vm467, %v409
        %473 = vst.msk [vmem:[%s226 + $0x28] sm:$0xff] %vm467, %v414
        %474 = vst.msk [vmem:[%s226 + $0x30] sm:$0xff] %vm467, %v419
        %475 = vst.msk [vmem:[%s226 + $0x38] sm:$0xff] %vm467, %v424
        %476 = vst.msk [vmem:[%s226 + $0x40] sm:$0xff] %vm467, %v429
        %477 = vst.msk [vmem:[%s226 + $0x48] sm:$0xff] %vm467, %v434
        %478 = vst.msk [vmem:[%s226 + $0x50] sm:$0xff] %vm467, %v439
        %479 = vst.msk [vmem:[%s226 + $0x58] sm:$0xff] %vm467, %v444
        %480 = vst.msk [vmem:[%s226 + $0x60] sm:$0xff] %vm467, %v449
        %481 = vst.msk [vmem:[%s226 + $0x68] sm:$0xff] %vm467, %v454
        %482 = vst.msk [vmem:[%s226 + $0x70] sm:$0xff] %vm467, %v459
        %483 = vst.msk [vmem:[%s226 + $0x78] sm:$0xff] %vm467, %v464
        %s484 = smul.u32 16, %s23
        %p485 = scmp.lt.s32.totalorder %s22, 1
        %s486 = scalar_select %p485, %s22, 1
        %p487 = scmp.lt.s32.totalorder %s484, 31
        %s488 = scalar_select %p487, %s484, 31
        %s489 = smul.addr %s486, 32
        %s490 = sadd.s32 %s488, %s489
        %s491 = smul.addr %s490, 8
        %s492 = scalar_lea.vmem %s3, %s491
        // Predicated region
        $region41: #{tpu_custom_call.1} parent=31 // pred_check
          %p493 = pneg %p120
        $region42: #{tpu_custom_call.1} parent=31 // pred_check_branch
          %495 = sbr.rel (%p493) target = $region44
        $region43: #{tpu_custom_call.1} parent=31 // pred_region
          %s496 = smul.u32 16, %s23
        $region44: #{tpu_custom_call.1} parent=31 // pred_fallthru
          _
      $region32: #{tpu_custom_call.1} parent=5 // pred_fallthru
        _
      %p497 = scmp.le.s32.totalorder 2, %s13
      // Predicated region
      $region45: #{tpu_custom_call.1} parent=5 // pred_check
        %p498 = pneg %p497
      $region46: #{tpu_custom_call.1} parent=5 // pred_check_branch
        %500 = sbr.rel (%p498) target = $region48
      $region47: #{tpu_custom_call.1} parent=5 // pred_region
        %s501 = ssub.s32 %s13, 2
        // Predicated region
        $region49: #{tpu_custom_call.1} parent=47 // pred_check
          %p502 = pneg %p126
        $region50: #{tpu_custom_call.1} parent=47 // pred_check_branch
          %504 = sbr.rel (%p502) target = $region52
        $region51: #{tpu_custom_call.1} parent=47 // pred_region
          %s505 = smul.u32 16, %s25
          %p506 = scmp.lt.s32.totalorder %s24, 1
          %s507 = scalar_select %p506, %s24, 1
          %p508 = scmp.lt.s32.totalorder %s505, 31
          %s509 = scalar_select %p508, %s505, 31
          %s510 = smul.addr %s507, 32
          %s511 = sadd.s32 %s509, %s510
          %s512 = smul.addr %s511, 8
          %s513 = scalar_lea.vmem %s3, %s512
        $region52: #{tpu_custom_call.1} parent=47 // pred_fallthru
          _
      $region48: #{tpu_custom_call.1} parent=5 // pred_fallthru
        _
    $region6: #{tpu_custom_call.1} parent=1 // loop_footer
      %s17 = sadd.s32 1, %s13
    $region7: #{tpu_custom_call.1} parent=1 // loop_footer_branch
      %12 = sbr.rel target = $region3
    $region8: #{tpu_custom_call.1} parent=1 // loop_exit
      _
    %514 = vsyncpa [#allocation3], 1
    %s515 = scalar_lea.sflag [#allocation3], 1
    %516 = vsyncpa %s515, 1
    %517 = vsyncpa [#allocation5], 1

</llo_original>
